<compile_context>
chip_gen: v7x
topology: tpu7x:2x2x1
jax: 0.10.0
libtpu: 0.0.40
codegen_flags: <defaults>
</compile_context>

<pallas_src>
import functools

import jax
import jax.numpy as jnp
import numpy as np
from jax import lax
from jax.experimental import pallas as pl
from jax.experimental.pallas import tpu as pltpu


# ---------------------------------------------------------------------------
# Pass 1: K[c, c'] = sum_m g[c, m] * b[c', m]   (per batch element)
# ---------------------------------------------------------------------------
def _k_kernel(v_ref, wk_ref, bk_ref, k_ref, *, compute_dtype):
    i = pl.program_id(1)

    @pl.when(i == 0)
    def _init():
        k_ref[...] = jnp.zeros_like(k_ref)

    vt = v_ref[0]                                                     # (D, T)
    pre = jnp.dot(wk_ref[...], vt,
                  preferred_element_type=jnp.float32) + bk_ref[...]   # (2Ci, T)
    ci = k_ref.shape[1]
    g = pre[:ci].astype(compute_dtype)                                # (Ci, T)
    b = pre[ci:].astype(compute_dtype)                                # (Ci, T)
    # NT matmul, f32 accumulation into the resident output block.
    k_ref[0] += lax.dot_general(g, b, (((1,), (1,)), ((), ())),
                                preferred_element_type=jnp.float32)   # (Ci, Ci)


# ---------------------------------------------------------------------------
# Pass 2: out = Ww @ (K @ a) + shift + v     per (batch, token tile)
# ---------------------------------------------------------------------------
def _apply_kernel(v_ref, k_ref, wa_ref, ba_ref, ww_ref, shift_ref, out_ref, *,
                  compute_dtype):
    f32 = jnp.float32
    vt = v_ref[0]                                                     # (D, T)
    # a-branch conv (fc1 and 1/N already folded into wa/ba).
    a = jnp.dot(wa_ref[...], vt, preferred_element_type=f32) + ba_ref[...]
    y = jnp.dot(k_ref[0].astype(compute_dtype), a.astype(compute_dtype),
                preferred_element_type=f32)                           # (Ci, T)
    wy = jnp.dot(ww_ref[...], y, preferred_element_type=f32)          # (D, T)
    out_ref[0] = (wy + shift_ref[...] + vt).astype(out_ref.dtype)     # residual


# ---------------------------------------------------------------------------
# Parameter construction / folding
# ---------------------------------------------------------------------------
def init_params(key, in_channels, inter_channels):
    D, Ci = in_channels, inter_channels
    Cq = Ci // 4  # PyTorch writes inter_channels / 4; treated as int division.
    names_q = ["theta", "theta1", "theta2", "theta3",
               "phi", "phi1", "phi2", "phi3"]
    keys = jax.random.split(key, len(names_q) + 6)
    ki = iter(keys)

    def linear(k, out_c, in_c):
        s = 1.0 / np.sqrt(in_c)
        w = jax.random.uniform(k, (out_c, in_c), jnp.float32, -s, s)
        b = jax.random.uniform(jax.random.fold_in(k, 7), (out_c,),
                               jnp.float32, -s, s)
        return w, b

    p = {}
    p["g_w"], p["g_b"] = linear(next(ki), Ci, D)
    for name in names_q:
        p[name + "_w"], p[name + "_b"] = linear(next(ki), Cq, D)
    p["fc1_w"], p["fc1_b"] = linear(next(ki), Ci, D)
    p["fc2_w"], p["fc2_b"] = linear(next(ki), Ci, D)
    p["W_w"], p["W_b"] = linear(next(ki), D, Ci)
    # BatchNorm1d(D): non-zero gamma/beta so the full path is exercised.
    p["bn_gamma"] = jax.random.uniform(next(ki), (D,), jnp.float32, 0.5, 1.5)
    p["bn_beta"] = jax.random.uniform(next(ki), (D,), jnp.float32, -0.5, 0.5)
    p["bn_mean"] = jnp.zeros((D,), jnp.float32)
    p["bn_var"] = jnp.ones((D,), jnp.float32)
    return p


def _prep(p, n_tokens, eps=1e-5):
    """Fold the module's parameters into channels-first fused matrices."""
    hp = lax.Precision.HIGHEST
    th_w = jnp.concatenate([p[k + "_w"] for k in
                            ("theta", "theta1", "theta2", "theta3")], 0)
    th_b = jnp.concatenate([p[k + "_b"] for k in
                            ("theta", "theta1", "theta2", "theta3")], 0)
    ph_w = jnp.concatenate([p[k + "_w"] for k in
                            ("phi", "phi1", "phi2", "phi3")], 0)
    ph_b = jnp.concatenate([p[k + "_b"] for k in
                            ("phi", "phi1", "phi2", "phi3")], 0)
    ci, d = th_w.shape
    if ci != d:
        raise ValueError(
            "fc1/fc2 are Linear(in_channels, inter_channels) applied to "
            "inter_channels-wide features: the PyTorch module only runs when "
            "inter_channels == in_channels.")

    # a-branch: (vt @ th_w.T + th_b) @ fc1_w.T + fc1_b, with 1/N folded in.
    wa = jnp.matmul(p["fc1_w"], th_w, precision=hp) / n_tokens        # (Ci, D)
    ba = (jnp.matmul(th_b[None, :], p["fc1_w"].T, precision=hp)[0]
          + p["fc1_b"]) / n_tokens                                    # (Ci,)

    # b-branch folded the same way; stacked under the g conv for one fused conv.
    wb = jnp.matmul(p["fc2_w"], ph_w, precision=hp)                   # (Ci, D)
    bb = jnp.matmul(ph_b[None, :], p["fc2_w"].T, precision=hp)[0] + p["fc2_b"]
    wk = jnp.concatenate([p["g_w"], wb], 0)                           # (2Ci, D)
    bk = jnp.concatenate([p["g_b"], bb], 0)[:, None]                  # (2Ci, 1)

    # W projection with eval-mode BatchNorm folded into weight/bias.
    inv_std = 1.0 / jnp.sqrt(p["bn_var"] + eps)
    scale = p["bn_gamma"] * inv_std                                   # (D,)
    ww = p["W_w"] * scale[:, None]                                    # (D, Ci)
    shift = ((p["W_b"] - p["bn_mean"]) * scale + p["bn_beta"])[:, None]  # (D,1)

    f32 = lambda x: x.astype(jnp.float32)
    return dict(wa=f32(wa), ba=f32(ba)[:, None], wk=f32(wk), bk=f32(bk),
                ww=f32(ww), shift=f32(shift))


def _pick_tile(n, target):
    """Largest lane-dense (multiple-of-128) token tile <= target dividing n."""
    if n % 128 != 0:
        return n
    t = max(128, (min(target, n) // 128) * 128)
    while n % t != 0:
        t -= 128
    return t


# ---------------------------------------------------------------------------
# Forward wrapper
# ---------------------------------------------------------------------------
def im_gcn_forward(v, params, *, token_tile=512, compute_dtype=jnp.float32):
    """v: (B, D, N) float32 -> (B, D, N) float32 (channels-first throughout)."""
    B, D, N = v.shape
    q = _prep(params, N)
    Ci = q["wa"].shape[0]
    v = v.astype(jnp.float32)

    t = _pick_tile(N, token_tile)
    nt = N // t

    # Pass 1: accumulate K = g @ b^T per batch element (reduction axis last).
    k = pl.pallas_call(
        functools.partial(_k_kernel, compute_dtype=compute_dtype),
        out_shape=jax.ShapeDtypeStruct((B, Ci, Ci), jnp.float32),
        grid=(B, nt),
        in_specs=[
            pl.BlockSpec((1, D, t), lambda b, i: (b, 0, i)),
            pl.BlockSpec(q["wk"].shape, lambda b, i: (0, 0)),
            pl.BlockSpec(q["bk"].shape, lambda b, i: (0, 0)),
        ],
        out_specs=pl.BlockSpec((1, Ci, Ci), lambda b, i: (b, 0, 0)),
        compiler_params=pltpu.CompilerParams(
            dimension_semantics=("parallel", "arbitrary")),
    )(v, q["wk"], q["bk"])

    # Pass 2: out = Ww @ (K @ a) + shift + v, fully parallel over (B, tiles).
    out = pl.pallas_call(
        functools.partial(_apply_kernel, compute_dtype=compute_dtype),
        out_shape=jax.ShapeDtypeStruct((B, D, N), jnp.float32),
        grid=(B, nt),
        in_specs=[
            pl.BlockSpec((1, D, t), lambda b, i: (b, 0, i)),
            pl.BlockSpec((1, Ci, Ci), lambda b, i: (b, 0, 0)),
            pl.BlockSpec(q["wa"].shape, lambda b, i: (0, 0)),
            pl.BlockSpec(q["ba"].shape, lambda b, i: (0, 0)),
            pl.BlockSpec(q["ww"].shape, lambda b, i: (0, 0)),
            pl.BlockSpec(q["shift"].shape, lambda b, i: (0, 0)),
        ],
        out_specs=pl.BlockSpec((1, D, t), lambda b, i: (b, 0, i)),
        compiler_params=pltpu.CompilerParams(
            dimension_semantics=("parallel", "parallel")),
    )(v, k, q["wa"], q["ba"], q["ww"], q["shift"])
    return out


# ---------------------------------------------------------------------------
# Pure-JAX reference mirroring the PyTorch forward op-by-op (f32, full R)
# ---------------------------------------------------------------------------
def im_gcn_reference(v, p, eps=1e-5):
    hp = lax.Precision.HIGHEST
    B, D, N = v.shape
    vt = jnp.transpose(v, (0, 2, 1))                                  # (B, N, D)
    g_v = jnp.matmul(vt, p["g_w"].T, precision=hp) + p["g_b"]
    th_w = jnp.concatenate([p[k + "_w"] for k in
                            ("theta", "theta1", "theta2", "theta3")], 0)
    th_b = jnp.concatenate([p[k + "_b"] for k in
                            ("theta", "theta1", "theta2", "theta3")], 0)
    ph_w = jnp.concatenate([p[k + "_w"] for k in
                            ("phi", "phi1", "phi2", "phi3")], 0)
    ph_b = jnp.concatenate([p[k + "_b"] for k in
                            ("phi", "phi1", "phi2", "phi3")], 0)
    a = jnp.matmul(vt, th_w.T, precision=hp) + th_b
    a = jnp.matmul(a, p["fc1_w"].T, precision=hp) + p["fc1_b"]
    b = jnp.matmul(vt, ph_w.T, precision=hp) + ph_b
    b = jnp.matmul(b, p["fc2_w"].T, precision=hp) + p["fc2_b"]
    R = jnp.einsum("bnc,bmc->bnm", a, b, precision=hp)
    y = jnp.matmul(R / N, g_v, precision=hp)                          # (B, N, Ci)
    wy = jnp.matmul(y, p["W_w"].T, precision=hp) + p["W_b"]
    inv_std = 1.0 / jnp.sqrt(p["bn_var"] + eps)
    wy = (wy - p["bn_mean"]) * (p["bn_gamma"] * inv_std) + p["bn_beta"]
    return jnp.transpose(wy + vt, (0, 2, 1))                          # (B, D, N)


if __name__ == "__main__":
    key = jax.random.PRNGKey(0)
    B, D, N = 2, 32, 128
    in_channels = inter_channels = D  # fc1/fc2 require inter == in channels

    kv, kp = jax.random.split(key)
    v = jax.random.normal(kv, (B, D, N), jnp.float32)
    params = init_params(kp, in_channels, inter_channels)

    out = im_gcn_forward(v, params)
    jax.block_until_ready(out)
    assert out.shape == (B, D, N)

    ref = im_gcn_reference(v, params)
    np.testing.assert_allclose(np.asarray(out), np.asarray(ref),
                               rtol=2e-3, atol=2e-3)
    print("KERNEL_OK")
</pallas_src>

<mosaic_0001>
module attributes {stable_mosaic.version = 11 : i64} {
  func.func @_k_kernel(%arg0: i32, %arg1: i32, %arg2: memref<1x32x128xf32, #tpu.memory_space<vmem>>, %arg3: memref<64x32xf32, #tpu.memory_space<vmem>>, %arg4: memref<64x1xf32, #tpu.memory_space<vmem>>, %arg5: memref<1x32x32xf32, #tpu.memory_space<vmem>>) attributes {dimension_semantics = [#tpu.dimension_semantics<parallel>, #tpu.dimension_semantics<arbitrary>], iteration_bounds = array<i64: 2, 1>, scalar_prefetch = 0 : i64, scratch_operands = 0 : i64, tpu.core_type = #tpu.core_type<tc>, window_params = [{transform_indices = @transform_0, window_bounds = array<i64: 1, 32, 128>}, {pipeline_mode = #tpu.pipeline_mode<synchronous>, transform_indices = @transform_1, window_bounds = array<i64: 64, 32>}, {pipeline_mode = #tpu.pipeline_mode<synchronous>, transform_indices = @transform_2, window_bounds = array<i64: 64, 1>}, {transform_indices = @transform_3, window_bounds = array<i64: 1, 32, 32>}]} {
    %c0_i32 = arith.constant 0 : i32
    %0 = arith.cmpi eq, %arg1, %c0_i32 : i32
    %1 = arith.extui %0 : i1 to i32
    %c0_i32_0 = arith.constant 0 : i32
    %2 = arith.cmpi ne, %1, %c0_i32_0 : i32
    scf.if %2 {
      %cst_14 = arith.constant 0.000000e+00 : f32
      %19 = vector.broadcast %cst_14 : f32 to vector<1x32x32xf32>
      %c0_15 = arith.constant 0 : index
      %c0_16 = arith.constant 0 : index
      %c0_17 = arith.constant 0 : index
      %20 = vector.load %arg5[%c0_15, %c0_16, %c0_17] : memref<1x32x32xf32, #tpu.memory_space<vmem>>, vector<1x32x32xf32>
      tpu.vector_store %arg5[%c0_15, %c0_16, %c0_17], %19 {strides = array<i32>} : memref<1x32x32xf32, #tpu.memory_space<vmem>>, vector<1x32x32xf32>,
    } else {
    }
    %c0 = arith.constant 0 : index
    %c0_1 = arith.constant 0 : index
    %c0_2 = arith.constant 0 : index
    %3 = vector.load %arg2[%c0, %c0_1, %c0_2] : memref<1x32x128xf32, #tpu.memory_space<vmem>>, vector<1x32x128xf32>
    %4 = vector.shape_cast %3 : vector<1x32x128xf32> to vector<32x128xf32>
    %c0_3 = arith.constant 0 : index
    %c0_4 = arith.constant 0 : index
    %5 = vector.load %arg3[%c0_3, %c0_4] : memref<64x32xf32, #tpu.memory_space<vmem>>, vector<64x32xf32>
    %cst = arith.constant dense<0.000000e+00> : vector<64x128xf32>
    %6 = tpu.matmul %5, %4, %cst {dimension_numbers = #tpu.dot_dimension_numbers<[1], [0], [0], [1], [0, 0, 1, 1], [], []>} : vector<64x32xf32>, vector<32x128xf32>, vector<64x128xf32> -> vector<64x128xf32>
    %c0_5 = arith.constant 0 : index
    %c0_6 = arith.constant 0 : index
    %7 = vector.load %arg4[%c0_5, %c0_6] : memref<64x1xf32, #tpu.memory_space<vmem>>, vector<64x1xf32>
    %8 = vector.broadcast %7 : vector<64x1xf32> to vector<64x128xf32>
    %9 = arith.addf %6, %8 : vector<64x128xf32>
    %10 = vector.extract_strided_slice %9 {offsets = [0, 0], sizes = [32, 128], strides = [1, 1]} : vector<64x128xf32> to vector<32x128xf32>
    %11 = vector.extract_strided_slice %9 {offsets = [32, 0], sizes = [32, 128], strides = [1, 1]} : vector<64x128xf32> to vector<32x128xf32>
    %c0_7 = arith.constant 0 : index
    %c0_8 = arith.constant 0 : index
    %c0_9 = arith.constant 0 : index
    %12 = vector.load %arg5[%c0_7, %c0_8, %c0_9] : memref<1x32x32xf32, #tpu.memory_space<vmem>>, vector<1x32x32xf32>
    %13 = vector.shape_cast %12 : vector<1x32x32xf32> to vector<32x32xf32>
    %cst_10 = arith.constant dense<0.000000e+00> : vector<32x32xf32>
    %14 = tpu.matmul %10, %11, %cst_10 {dimension_numbers = #tpu.dot_dimension_numbers<[1], [1], [0], [0], [0, 0, 1, 0], [], []>} : vector<32x128xf32>, vector<32x128xf32>, vector<32x32xf32> -> vector<32x32xf32>
    %15 = arith.addf %13, %14 : vector<32x32xf32>
    %c0_11 = arith.constant 0 : index
    %c0_12 = arith.constant 0 : index
    %c0_13 = arith.constant 0 : index
    %16 = vector.load %arg5[%c0_11, %c0_12, %c0_13] : memref<1x32x32xf32, #tpu.memory_space<vmem>>, vector<1x32x32xf32>
    %17 = vector.shape_cast %16 : vector<1x32x32xf32> to vector<32x32xf32>
    %18 = vector.shape_cast %15 : vector<32x32xf32> to vector<1x32x32xf32>
    tpu.vector_store %arg5[%c0_11, %c0_12, %c0_13], %18 {strides = array<i32>} : memref<1x32x32xf32, #tpu.memory_space<vmem>>, vector<1x32x32xf32>,
    return
  }
  func.func @transform_0(%arg0: i32, %arg1: i32) -> (i32, i32, i32) {
    %c0_i32 = arith.constant 0 : i32
    %c0_i32_0 = arith.constant 0 : i32
    return %arg0, %c0_i32, %arg1 : i32, i32, i32
  }
  func.func @transform_1(%arg0: i32, %arg1: i32) -> (i32, i32) {
    %c0_i32 = arith.constant 0 : i32
    %c0_i32_0 = arith.constant 0 : i32
    %c0_i32_1 = arith.constant 0 : i32
    return %c0_i32, %c0_i32_0 : i32, i32
  }
  func.func @transform_2(%arg0: i32, %arg1: i32) -> (i32, i32) {
    %c0_i32 = arith.constant 0 : i32
    %c0_i32_0 = arith.constant 0 : i32
    %c0_i32_1 = arith.constant 0 : i32
    return %c0_i32, %c0_i32_0 : i32, i32
  }
  func.func @transform_3(%arg0: i32, %arg1: i32) -> (i32, i32, i32) {
    %c0_i32 = arith.constant 0 : i32
    %c0_i32_0 = arith.constant 0 : i32
    %c0_i32_1 = arith.constant 0 : i32
    return %arg0, %c0_i32, %c0_i32_0 : i32, i32, i32
  }
}

</mosaic_0001>

<llo_original>
// kernel: tpu_custom_call.1
$region0: #{tpu_custom_call.1}
  #allocation0 [shape = 'u32[]', space=smem, size = 0x4, offset = 0x4, fixed_abs, tag = 'smem constant byte address 0x4 - core index']
  #allocation1 [shape = 'u32[144,128]{1,0:T(1,128)}', space=vmem, size = 0x12000, scoped, tag = 'internal scratch']
  %s0 = inlined_call_operand.vmem [shape: f32[2,32,128], index: 0, kind: input, shape index: {}]
  %s1 = inlined_call_operand.vmem [shape: f32[64,32], index: 1, kind: input, shape index: {}]
  %s2 = inlined_call_operand.vmem [shape: f32[64,1], index: 2, kind: input, shape index: {}]
  %s3 = inlined_call_operand.hbm [shape: f32[2,32,32], index: 3, kind: output, shape index: {}]
  %s4 = sld [smem:[#allocation0]]
  $region49: #{tpu_custom_call.1} parent=0
    _
  %s6 = ssub.s32 1, %s4
  %s7 = scalar_select 0, %s6, %s4
  $region1: #{tpu_custom_call.1} parent=0
    #allocation2 [shape = 'u8[32768]{0}', space=vmem, size = 0x8000, scoped, tag = 'output window, operand 0']
    #allocation3 [shape = 's32[2]{0}', space=sflag, size = 0x8, scoped, tag = 'scoped memory for tpu_custom_call.1']
    %8 = vsyncpa [#allocation3], 0
    %s9 = scalar_lea.sflag [#allocation3], 1
    %10 = vsyncpa %s9, 0
    loop: start=0, step=1, limit=4
    $region2: #{tpu_custom_call.1} parent=1 // loop_pre_header
      _
    $region3: #{tpu_custom_call.1} parent=1 // loop_header
      %s12 = sphi 0, %s16
      %p13 = scmp.ge.s32.totalorder %s12, 4
      %s19 = sphi 0, %s31
      %s20 = sphi 0, %s27
      %s21 = sphi 0, %s19
      %s22 = sphi 0, %s20
      %s23 = sphi 0, %s21
      %s24 = sphi 0, %s22
      %s36 = sphi 0, %s38
      %s39 = sphi 0, %s36
      %s40 = sphi 0, %s39
      %s56 = sphi 0, %s40
      %s60 = sphi 0, %s60
      %s62 = sphi 0, %s60
      %s63 = sphi 0, %s62
      %s77 = sphi 0, %s63
      %s81 = sphi 0, %s81
      %s83 = sphi 0, %s81
      %s84 = sphi 0, %s83
      %s98 = sphi 0, %s84
      %s104 = sphi 0, %s106
      %s107 = sphi 0, %s104
      %s108 = sphi 0, %s107
      %s124 = sphi 0, %s108
    $region4: #{tpu_custom_call.1} parent=1 // loop_header_branch
      %15 = sbr.rel (%p13) target = $region8
    $region5: #{tpu_custom_call.1} parent=1 // loop_body
      %s17 = ssub.s32 %s12, 1
      %s18 = ssub.s32 %s12, 2
      %s25 = sadd.s32 1, %s20
      %p26 = scmp.ge.s32.totalorder %s25, 1
      %s27 = scalar_select %p26, 0, %s25
      %s28 = sadd.s32 1, %s19
      %s29 = scalar_select %p26, %s28, %s19
      %p30 = scmp.ge.s32.totalorder %s29, 2
      %s31 = scalar_select %p30, 0, %s29
      %s32 = ssub.s32 %s19, %s31
      %s33 = ssub.s32 %s20, %s27
      %s34 = sor.u32 %s32, %s33
      %p35 = scmp.eq.s32.totalorder %s34, 0
      %s37 = sadd.s32 %s36, 1
      %s38 = scalar_select %p35, %s36, %s37
      %p41 = pneg %p35
      %p42 = scmp.eq.s32.totalorder %s12, 1
      %p43 = por %p41, %p42
      %p44 = scmp.ne.s32.totalorder %s36, %s39
      %p45 = scmp.eq.s32.totalorder %s12, 0
      %p46 = por %p44, %p45
      %p47 = scmp.ne.s32.totalorder %s36, %s39
      %p48 = scmp.eq.s32.totalorder %s17, 1
      %p49 = por %p47, %p48
      %p50 = scmp.ne.s32.totalorder %s39, %s40
      %p51 = scmp.eq.s32.totalorder %s17, 0
      %p52 = por %p50, %p51
      %p53 = scmp.ne.s32.totalorder %s39, %s40
      %p54 = scmp.eq.s32.totalorder %s18, 1
      %p55 = por %p53, %p54
      %p57 = scmp.ne.s32.totalorder %s40, %s56
      %p58 = scmp.eq.s32.totalorder %s18, 0
      %p59 = por %p57, %p58
      %s61 = sadd.s32 %s60, 1
      %p64 = scmp.eq.s32.totalorder %s12, 1
      %p65 = scmp.ne.s32.totalorder %s60, %s62
      %p66 = scmp.eq.s32.totalorder %s12, 0
      %p67 = por %p65, %p66
      %p68 = scmp.ne.s32.totalorder %s60, %s62
      %p69 = scmp.eq.s32.totalorder %s17, 1
      %p70 = por %p68, %p69
      %p71 = scmp.ne.s32.totalorder %s62, %s63
      %p72 = scmp.eq.s32.totalorder %s17, 0
      %p73 = por %p71, %p72
      %p74 = scmp.ne.s32.totalorder %s62, %s63
      %p75 = scmp.eq.s32.totalorder %s18, 1
      %p76 = por %p74, %p75
      %p78 = scmp.ne.s32.totalorder %s63, %s77
      %p79 = scmp.eq.s32.totalorder %s18, 0
      %p80 = por %p78, %p79
      %s82 = sadd.s32 %s81, 1
      %p85 = scmp.eq.s32.totalorder %s12, 1
      %p86 = scmp.ne.s32.totalorder %s81, %s83
      %p87 = scmp.eq.s32.totalorder %s12, 0
      %p88 = por %p86, %p87
      %p89 = scmp.ne.s32.totalorder %s81, %s83
      %p90 = scmp.eq.s32.totalorder %s17, 1
      %p91 = por %p89, %p90
      %p92 = scmp.ne.s32.totalorder %s83, %s84
      %p93 = scmp.eq.s32.totalorder %s17, 0
      %p94 = por %p92, %p93
      %p95 = scmp.ne.s32.totalorder %s83, %s84
      %p96 = scmp.eq.s32.totalorder %s18, 1
      %p97 = por %p95, %p96
      %p99 = scmp.ne.s32.totalorder %s84, %s98
      %p100 = scmp.eq.s32.totalorder %s18, 0
      %p101 = por %p99, %p100
      %s102 = ssub.s32 %s19, %s31
      %p103 = scmp.eq.s32.totalorder %s102, 0
      %s105 = sadd.s32 %s104, 1
      %s106 = scalar_select %p103, %s104, %s105
      %p109 = pneg %p103
      %p110 = scmp.eq.s32.totalorder %s12, 1
      %p111 = por %p109, %p110
      %p112 = scmp.ne.s32.totalorder %s104, %s107
      %p113 = scmp.eq.s32.totalorder %s12, 0
      %p114 = por %p112, %p113
      %p115 = scmp.ne.s32.totalorder %s104, %s107
      %p116 = scmp.eq.s32.totalorder %s17, 1
      %p117 = por %p115, %p116
      %p118 = scmp.ne.s32.totalorder %s107, %s108
      %p119 = scmp.eq.s32.totalorder %s17, 0
      %p120 = por %p118, %p119
      %p121 = scmp.ne.s32.totalorder %s107, %s108
      %p122 = scmp.eq.s32.totalorder %s18, 1
      %p123 = por %p121, %p122
      %p125 = scmp.ne.s32.totalorder %s108, %s124
      %p126 = scmp.eq.s32.totalorder %s18, 0
      %p127 = por %p125, %p126
      %p128 = scmp.le.s32.totalorder 1, %s12
      %p129 = scmp.lt.s32.totalorder %s12, 3
      %p130 = pnand %p128, %p129
      %p131 = pneg %p130
      // Predicated region
      $region9: #{tpu_custom_call.1} parent=5 // pred_check
        _
      $region10: #{tpu_custom_call.1} parent=5 // pred_check_branch
        %133 = sbr.rel (%p130) target = $region12
      $region11: #{tpu_custom_call.1} parent=5 // pred_region
        %s134 = ssub.s32 %s12, 1
        // Predicated region
        $region13: #{tpu_custom_call.1} parent=11 // pred_check
          %p135 = pneg %p73
        $region14: #{tpu_custom_call.1} parent=11 // pred_check_branch
          %137 = sbr.rel (%p135) target = $region16
        $region15: #{tpu_custom_call.1} parent=11 // pred_region
          _
        $region16: #{tpu_custom_call.1} parent=11 // pred_fallthru
          _
        // Predicated region
        $region17: #{tpu_custom_call.1} parent=11 // pred_check
          %p138 = pneg %p94
        $region18: #{tpu_custom_call.1} parent=11 // pred_check_branch
          %140 = sbr.rel (%p138) target = $region20
        $region19: #{tpu_custom_call.1} parent=11 // pred_region
          _
        $region20: #{tpu_custom_call.1} parent=11 // pred_fallthru
          _
      $region12: #{tpu_custom_call.1} parent=5 // pred_fallthru
        _
      %p141 = scmp.lt.s32.totalorder %s12, 2
      // Predicated region
      $region21: #{tpu_custom_call.1} parent=5 // pred_check
        %p142 = pneg %p141
      $region22: #{tpu_custom_call.1} parent=5 // pred_check_branch
        %144 = sbr.rel (%p142) target = $region24
      $region23: #{tpu_custom_call.1} parent=5 // pred_region
        // Predicated region
        $region25: #{tpu_custom_call.1} parent=23 // pred_check
          %p145 = pneg %p46
        $region26: #{tpu_custom_call.1} parent=23 // pred_check_branch
          %147 = sbr.rel (%p145) target = $region28
        $region27: #{tpu_custom_call.1} parent=23 // pred_region
          %p148 = scmp.lt.s32.totalorder %s19, 1
          %s149 = scalar_select %p148, %s19, 1
          %p150 = scmp.lt.s32.totalorder %s20, 0
          %s151 = scalar_select %p150, %s20, 0
          %s152 = smul.addr %s149, 4
          %s153 = sadd.s32 %s151, %s152
          %s154 = smul.addr %s153, 8
          %s155 = scalar_lea.vmem %s0, %s154
        $region28: #{tpu_custom_call.1} parent=23 // pred_fallthru
          _
      $region24: #{tpu_custom_call.1} parent=5 // pred_fallthru
        _
      %p156 = scmp.le.s32.totalorder 1, %s12
      %p157 = scmp.lt.s32.totalorder %s12, 3
      %p158 = pnand %p156, %p157
      %p159 = pneg %p158
      // Predicated region
      $region29: #{tpu_custom_call.1} parent=5 // pred_check
        _
      $region30: #{tpu_custom_call.1} parent=5 // pred_check_branch
        %161 = sbr.rel (%p158) target = $region32
      $region31: #{tpu_custom_call.1} parent=5 // pred_region
        %s162 = ssub.s32 %s12, 1
        %p163 = scmp.lt.s32.totalorder %s21, 1
        %s164 = scalar_select %p163, %s21, 1
        %p165 = scmp.lt.s32.totalorder %s22, 0
        %s166 = scalar_select %p165, %s22, 0
        %s167 = smul.addr %s164, 4
        %s168 = sadd.s32 %s166, %s167
        %s169 = smul.addr %s168, 8
        %s170 = scalar_lea.vmem %s0, %s169
        %p171 = pneg %p52
        %p172 = pneg %p49
        %p173 = pneg %p73
        %p174 = pneg %p70
        %p175 = pneg %p94
        %p176 = pneg %p91
        %p177 = pneg %p120
        %p178 = pneg %p117
        %s179 = sand.u32 %s107, 1
        %s180 = scalar_lea.sflag [#allocation3], %s179
        %s181 = sand.u32 %s107, 1
        %s182 = smul.addr %s181, 32
        %s183 = scalar_lea.vmem [#allocation2], %s182
        %p184 = scmp.lt.s32.totalorder %s21, 1
        %s185 = scalar_select %p184, %s21, 1
        %p186 = scmp.lt.s32.totalorder %s22, 0
        %s187 = scalar_select %p186, %s22, 0
        %s188 = smul.addr %s185, 4
        %s189 = sadd.s32 %s187, %s188
        %s190 = smul.addr %s189, 8
        %s191 = scalar_lea.vmem %s0, %s190
        %p192 = scmp.eq.s32.totalorder %s22, 0
        // Predicated region
        $region33: #{tpu_custom_call.1} parent=31 // pred_check
          %p193 = pneg %p192
        $region34: #{tpu_custom_call.1} parent=31 // pred_check_branch
          %195 = sbr.rel (%p193) target = $region36
        $region35: #{tpu_custom_call.1} parent=31 // pred_region
          %vm196 = vcmask 261120
          %197 = vst.msk [vmem:[%s183] sm:$0xff] %vm196, 0.0
          %198 = vst.msk [vmem:[%s183 + $0x8] sm:$0xff] %vm196, 0.0
          %199 = vst.msk [vmem:[%s183 + $0x10] sm:$0xff] %vm196, 0.0
          %200 = vst.msk [vmem:[%s183 + $0x18] sm:$0xff] %vm196, 0.0
        $region36: #{tpu_custom_call.1} parent=31 // pred_fallthru
          _
        %v201 = vld [vmem:[%s191] sm:$0xff]
        %v202 = vld [vmem:[%s191 + $0x8] sm:$0xff]
        %v203 = vld [vmem:[%s191 + $0x10] sm:$0xff]
        %v204 = vld [vmem:[%s191 + $0x18] sm:$0xff]
        %v205 = vld [vmem:[%s1] sm:$0xff]
        %v206 = vld [vmem:[%s1 + $0x8] sm:$0xff]
        %v207 = vld [vmem:[%s1 + $0x10] sm:$0xff]
        %v208 = vld [vmem:[%s1 + $0x18] sm:$0xff]
        %v209 = vld [vmem:[%s1 + $0x20] sm:$0xff]
        %v210 = vld [vmem:[%s1 + $0x28] sm:$0xff]
        %v211 = vld [vmem:[%s1 + $0x30] sm:$0xff]
        %v212 = vld [vmem:[%s1 + $0x38] sm:$0xff]
        %v213 = vld [vmem:[%s2] sm:$0xff]
        %v214 = vld [vmem:[%s2 + $0x8] sm:$0xff]
        %v215 = vld [vmem:[%s2 + $0x10] sm:$0xff]
        %v216 = vld [vmem:[%s2 + $0x18] sm:$0xff]
        %v217 = vld [vmem:[%s2 + $0x20] sm:$0xff]
        %v218 = vld [vmem:[%s2 + $0x28] sm:$0xff]
        %v219 = vld [vmem:[%s2 + $0x30] sm:$0xff]
        %v220 = vld [vmem:[%s2 + $0x38] sm:$0xff]
        %222 = vset.pattern.permute.xlu0 0
        %223 = vperm.xlu0 %222, %v213
        %v224 = vpop.permute.xlu0 %223
        %227 = vset.pattern.permute.xlu0 0
        %228 = vperm.xlu0 %227, %v214
        %v229 = vpop.permute.xlu0 %228
        %232 = vset.pattern.permute.xlu0 0
        %233 = vperm.xlu0 %232, %v215
        %v234 = vpop.permute.xlu0 %233
        %237 = vset.pattern.permute.xlu0 0
        %238 = vperm.xlu0 %237, %v216
        %v239 = vpop.permute.xlu0 %238
        %242 = vset.pattern.permute.xlu0 0
        %243 = vperm.xlu0 %242, %v217
        %v244 = vpop.permute.xlu0 %243
        %247 = vset.pattern.permute.xlu0 0
        %248 = vperm.xlu0 %247, %v218
        %v249 = vpop.permute.xlu0 %248
        %252 = vset.pattern.permute.xlu0 0
        %253 = vperm.xlu0 %252, %v219
        %v254 = vpop.permute.xlu0 %253
        %257 = vset.pattern.permute.xlu0 0
        %258 = vperm.xlu0 %257, %v220
        %v259 = vpop.permute.xlu0 %258
        %vm261 = vcmask 261120
        %v263 = vsel %vm261, %v205, 0
        %v266 = vsel %vm261, %v206, 0
        %v269 = vsel %vm261, %v207, 0
        %v272 = vsel %vm261, %v208, 0
        %v275 = vsel %vm261, %v209, 0
        %v278 = vsel %vm261, %v210, 0
        %v281 = vsel %vm261, %v211, 0
        %v284 = vsel %vm261, %v212, 0
        %286 = vmatprep.subr.mxu0 0.0
        %287 = vmatpush1.msra.mxu0 %v201
        %288 = vmatprep.subr.mxu0 0.0
        %289 = vmatpush1.msra.mxu0 %v202
        %290 = vmatprep.subr.mxu0 0.0
        %291 = vmatpush1.msra.mxu0 %v203
        %292 = vmatprep.subr.mxu0 0.0
        %293 = vmatpush1.msra.mxu0 %v204
        %294 = vmatprep.subr.mxu0 0.0
        %295 = vmatpush1.msra.mxu0 0.0
        %296 = vmatprep.subr.mxu0 0.0
        %297 = vmatpush1.msra.mxu0 0.0
        %298 = vmatprep.subr.mxu0 0.0
        %299 = vmatpush1.msra.mxu0 0.0
        %300 = vmatprep.subr.mxu0 0.0
        %301 = vmatpush1.msra.mxu0 0.0
        %302 = vmatprep.subr.mxu0 0.0
        %303 = vmatpush1.msra.mxu0 0.0
        %304 = vmatprep.subr.mxu0 0.0
        %305 = vmatpush1.msra.mxu0 0.0
        %306 = vmatprep.subr.mxu0 0.0
        %307 = vmatpush1.msra.mxu0 0.0
        %308 = vmatprep.subr.mxu0 0.0
        %309 = vmatpush1.msra.mxu0 0.0
        %310 = vmatprep.subr.mxu0 0.0
        %311 = vmatpush1.msra.mxu0 0.0
        %312 = vmatprep.subr.mxu0 0.0
        %313 = vmatpush1.msra.mxu0 0.0
        %314 = vmatprep.subr.mxu0 0.0
        %315 = vmatpush1.msra.mxu0 0.0
        %316 = vmatprep.subr.mxu0 0.0
        %317 = vmatpush1.msra.mxu0 0.0
        %318 = vmatprep.subr.mxu0 0.0
        %319 = vmatpush1.msra.mxu0 0.0
        %320 = vmatprep.subr.mxu0 0.0
        %321 = vmatpush1.msra.mxu0 0.0
        %322 = vmatprep.subr.mxu0 0.0
        %323 = vmatpush1.msra.mxu0 0.0
        %324 = vmatprep.subr.mxu0 0.0
        %325 = vmatpush1.msra.mxu0 0.0
        %326 = vmatprep.subr.mxu0 0.0
        %327 = vmatpush1.msra.mxu0 0.0
        %328 = vmatprep.subr.mxu0 0.0
        %329 = vmatpush1.msra.mxu0 0.0
        %330 = vmatprep.subr.mxu0 0.0
        %331 = vmatpush1.msra.mxu0 0.0
        %332 = vmatprep.subr.mxu0 0.0
        %333 = vmatpush1.msra.mxu0 0.0
        %334 = vmatprep.subr.mxu0 0.0
        %335 = vmatpush1.msra.mxu0 0.0
        %336 = vmatprep.subr.mxu0 0.0
        %337 = vmatpush1.msra.mxu0 0.0
        %338 = vmatprep.subr.mxu0 0.0
        %339 = vmatpush1.msra.mxu0 0.0
        %340 = vmatprep.subr.mxu0 0.0
        %341 = vmatpush1.msra.mxu0 0.0
        %342 = vmatprep.subr.mxu0 0.0
        %343 = vmatpush1.msra.mxu0 0.0
        %344 = vmatprep.subr.mxu0 0.0
        %345 = vmatpush1.msra.mxu0 0.0
        %346 = vmatprep.subr.mxu0 0.0
        %347 = vmatpush1.msra.mxu0 0.0
        %348 = vmatprep.subr.mxu0 0.0
        %349 = vmatpush1.msra.mxu0 0.0
        %350 = vmatprep.mubr.f32.mxu0 0.0
        %351 = vmatmul.mubr.f32.gmra.mrb[0].mxu0 %v263
        %v352 = vpop.f32.mrb[0].mxu0
        %v353 = vadd.f32 %v224, %v352
        %v354 = vpop.f32.mrb[0].mxu0
        %355 = vmatprep.mubr.f32.mxu0 0.0
        %356 = vmatmul.mubr.f32.gmra.mrb[0].mxu0 %v266
        %v357 = vpop.f32.mrb[0].mxu0
        %v358 = vadd.f32 %v229, %v357
        %v359 = vpop.f32.mrb[0].mxu0
        %360 = vmatprep.mubr.f32.mxu0 0.0
        %361 = vmatmul.mubr.f32.gmra.mrb[0].mxu0 %v269
        %v362 = vpop.f32.mrb[0].mxu0
        %v363 = vadd.f32 %v234, %v362
        %v364 = vpop.f32.mrb[0].mxu0
        %365 = vmatprep.mubr.f32.mxu0 0.0
        %366 = vmatmul.mubr.f32.gmra.mrb[0].mxu0 %v272
        %v367 = vpop.f32.mrb[0].mxu0
        %v368 = vadd.f32 %v239, %v367
        %v369 = vpop.f32.mrb[0].mxu0
        %370 = vmatprep.mubr.f32.mxu0 0.0
        %371 = vmatmul.mubr.f32.gmra.mrb[0].mxu0 %v275
        %v372 = vpop.f32.mrb[0].mxu0
        %v373 = vadd.f32 %v244, %v372
        %v374 = vpop.f32.mrb[0].mxu0
        %375 = vmatprep.mubr.f32.mxu0 0.0
        %376 = vmatmul.mubr.f32.gmra.mrb[0].mxu0 %v278
        %v377 = vpop.f32.mrb[0].mxu0
        %v378 = vadd.f32 %v249, %v377
        %v379 = vpop.f32.mrb[0].mxu0
        %380 = vmatprep.mubr.f32.mxu0 0.0
        %381 = vmatmul.mubr.f32.gmra.mrb[0].mxu0 %v281
        %v382 = vpop.f32.mrb[0].mxu0
        %v383 = vadd.f32 %v254, %v382
        %v384 = vpop.f32.mrb[0].mxu0
        %385 = vmatprep.mubr.f32.mxu0 0.0
        %386 = vmatmul.mubr.f32.gmra.mrb[0].mxu0 %v284
        %v387 = vpop.f32.mrb[0].mxu0
        %v388 = vadd.f32 %v259, %v387
        %v389 = vpop.f32.mrb[0].mxu0
        %390 = vdwg.mxu0
        %v391 = vld [vmem:[%s183] sm:$0xff]
        %v392 = vld [vmem:[%s183 + $0x8] sm:$0xff]
        %v393 = vld [vmem:[%s183 + $0x10] sm:$0xff]
        %v394 = vld [vmem:[%s183 + $0x18] sm:$0xff]
        %395 = vmatprep.subr.mxu0 0.0
        %396 = vmatpush1.xpose.msra.mxu0 %v373
        %397 = vmatprep.subr.mxu0 0.0
        %398 = vmatpush1.xpose.msra.mxu0 %v378
        %399 = vmatprep.subr.mxu0 0.0
        %400 = vmatpush1.xpose.msra.mxu0 %v383
        %401 = vmatprep.subr.mxu0 0.0
        %402 = vmatpush1.xpose.msra.mxu0 %v388
        %403 = vmatprep.subr.mxu0 0.0
        %404 = vmatpush1.xpose.msra.mxu0 0.0
        %405 = vmatprep.subr.mxu0 0.0
        %406 = vmatpush1.xpose.msra.mxu0 0.0
        %407 = vmatprep.subr.mxu0 0.0
        %408 = vmatpush1.xpose.msra.mxu0 0.0
        %409 = vmatprep.subr.mxu0 0.0
        %410 = vmatpush1.xpose.msra.mxu0 0.0
        %411 = vmatprep.subr.mxu0 0.0
        %412 = vmatpush1.xpose.msra.mxu0 0.0
        %413 = vmatprep.subr.mxu0 0.0
        %414 = vmatpush1.xpose.msra.mxu0 0.0
        %415 = vmatprep.subr.mxu0 0.0
        %416 = vmatpush1.xpose.msra.mxu0 0.0
        %417 = vmatprep.subr.mxu0 0.0
        %418 = vmatpush1.xpose.msra.mxu0 0.0
        %419 = vmatprep.subr.mxu0 0.0
        %420 = vmatpush1.xpose.msra.mxu0 0.0
        %421 = vmatprep.subr.mxu0 0.0
        %422 = vmatpush1.xpose.msra.mxu0 0.0
        %423 = vmatprep.subr.mxu0 0.0
        %424 = vmatpush1.xpose.msra.mxu0 0.0
        %425 = vmatprep.subr.mxu0 0.0
        %426 = vmatpush1.xpose.msra.mxu0 0.0
        %427 = vmatprep.subr.mxu0 0.0
        %428 = vmatpush1.xpose.msra.mxu0 0.0
        %429 = vmatprep.subr.mxu0 0.0
        %430 = vmatpush1.xpose.msra.mxu0 0.0
        %431 = vmatprep.subr.mxu0 0.0
        %432 = vmatpush1.xpose.msra.mxu0 0.0
        %433 = vmatprep.subr.mxu0 0.0
        %434 = vmatpush1.xpose.msra.mxu0 0.0
        %435 = vmatprep.subr.mxu0 0.0
        %436 = vmatpush1.xpose.msra.mxu0 0.0
        %437 = vmatprep.subr.mxu0 0.0
        %438 = vmatpush1.xpose.msra.mxu0 0.0
        %439 = vmatprep.subr.mxu0 0.0
        %440 = vmatpush1.xpose.msra.mxu0 0.0
        %441 = vmatprep.subr.mxu0 0.0
        %442 = vmatpush1.xpose.msra.mxu0 0.0
        %443 = vmatprep.subr.mxu0 0.0
        %444 = vmatpush1.xpose.msra.mxu0 0.0
        %445 = vmatprep.subr.mxu0 0.0
        %446 = vmatpush1.xpose.msra.mxu0 0.0
        %447 = vmatprep.subr.mxu0 0.0
        %448 = vmatpush1.xpose.msra.mxu0 0.0
        %449 = vmatprep.subr.mxu0 0.0
        %450 = vmatpush1.xpose.msra.mxu0 0.0
        %451 = vmatprep.subr.mxu0 0.0
        %452 = vmatpush1.xpose.msra.mxu0 0.0
        %453 = vmatprep.subr.mxu0 0.0
        %454 = vmatpush1.xpose.msra.mxu0 0.0
        %455 = vmatprep.subr.mxu0 0.0
        %456 = vmatpush1.xpose.msra.mxu0 0.0
        %457 = vmatprep.subr.mxu0 0.0
        %458 = vmatpush1.xpose.msra.mxu0 0.0
        %459 = vmatprep.mubr.f32.mxu0 0.0
        %460 = vmatmul.mubr.f32.gmra.mrb[0].mxu0 %v353
        %v461 = vpop.f32.mrb[0].mxu0
        %v462 = vadd.f32 0.0, %v461
        %v463 = vpop.f32.mrb[0].mxu0
        %464 = vmatprep.mubr.f32.mxu0 0.0
        %465 = vmatmul.mubr.f32.gmra.mrb[0].mxu0 %v358
        %v466 = vpop.f32.mrb[0].mxu0
        %v467 = vadd.f32 0.0, %v466
        %v468 = vpop.f32.mrb[0].mxu0
        %469 = vmatprep.mubr.f32.mxu0 0.0
        %470 = vmatmul.mubr.f32.gmra.mrb[0].mxu0 %v363
        %v471 = vpop.f32.mrb[0].mxu0
        %v472 = vadd.f32 0.0, %v471
        %v473 = vpop.f32.mrb[0].mxu0
        %474 = vmatprep.mubr.f32.mxu0 0.0
        %475 = vmatmul.mubr.f32.gmra.mrb[0].mxu0 %v368
        %v476 = vpop.f32.mrb[0].mxu0
        %v477 = vadd.f32 0.0, %v476
        %v478 = vpop.f32.mrb[0].mxu0
        %479 = vdwg.mxu0
        %v480 = vadd.f32 %v391, %v462
        %v481 = vadd.f32 %v392, %v467
        %v482 = vadd.f32 %v393, %v472
        %v483 = vadd.f32 %v394, %v477
        %484 = vst.msk [vmem:[%s183] sm:$0xff] %vm261, %v480
        %485 = vst.msk [vmem:[%s183 + $0x8] sm:$0xff] %vm261, %v481
        %486 = vst.msk [vmem:[%s183 + $0x10] sm:$0xff] %vm261, %v482
        %487 = vst.msk [vmem:[%s183 + $0x18] sm:$0xff] %vm261, %v483
        %s488 = sand.u32 %s107, 1
        %s489 = scalar_lea.sflag [#allocation3], %s488
        %s490 = sand.u32 %s107, 1
        %s491 = smul.addr %s490, 32
        %s492 = scalar_lea.vmem [#allocation2], %s491
        // Predicated region
        $region37: #{tpu_custom_call.1} parent=31 // pred_check
          %p493 = pneg %p117
        $region38: #{tpu_custom_call.1} parent=31 // pred_check_branch
          %495 = sbr.rel (%p493) target = $region40
        $region39: #{tpu_custom_call.1} parent=31 // pred_region
          %s497 = ssub.s32 512, 512
          %498 = vsyncadd %s489, %s497
          %s499 = smul.addr %s21, 4
          %s500 = smul.addr %s499, 128
          %s501 = scalar_lea.hbm %s3, %s500
          %s502 = sshll.u32 %s492, 4
          %s503 = int_to_ptr.vmem [resolvable:$true] %s502
          %508 = dma.vmem_to_hbm [thread:$0]  %s503, 512, %s501, %s489, 128, 128, 8
        $region40: #{tpu_custom_call.1} parent=31 // pred_fallthru
          _
      $region32: #{tpu_custom_call.1} parent=5 // pred_fallthru
        _
      %p509 = scmp.le.s32.totalorder 2, %s12
      // Predicated region
      $region41: #{tpu_custom_call.1} parent=5 // pred_check
        %p510 = pneg %p509
      $region42: #{tpu_custom_call.1} parent=5 // pred_check_branch
        %512 = sbr.rel (%p510) target = $region44
      $region43: #{tpu_custom_call.1} parent=5 // pred_region
        %s513 = ssub.s32 %s12, 2
        // Predicated region
        $region45: #{tpu_custom_call.1} parent=43 // pred_check
          %p514 = pneg %p123
        $region46: #{tpu_custom_call.1} parent=43 // pred_check_branch
          %516 = sbr.rel (%p514) target = $region48
        $region47: #{tpu_custom_call.1} parent=43 // pred_region
          %s517 = sand.u32 %s108, 1
          %s518 = scalar_lea.sflag [#allocation3], %s517
          %s519 = sand.u32 %s108, 1
          %s520 = smul.addr %s519, 32
          %s521 = scalar_lea.vmem [#allocation2], %s520
          %522 = dma.done %s518, 512
        $region48: #{tpu_custom_call.1} parent=43 // pred_fallthru
          _
      $region44: #{tpu_custom_call.1} parent=5 // pred_fallthru
        _
    $region6: #{tpu_custom_call.1} parent=1 // loop_footer
      %s16 = sadd.s32 1, %s12
    $region7: #{tpu_custom_call.1} parent=1 // loop_footer_branch
      %11 = sbr.rel target = $region3
    $region8: #{tpu_custom_call.1} parent=1 // loop_exit
      _
    %523 = vsyncpa [#allocation3], 1
    %s524 = scalar_lea.sflag [#allocation3], 1
    %525 = vsyncpa %s524, 1

</llo_original>
